<compile_context>
chip_gen: v6e
topology: v6e:2x2x1
jax: 0.10.0
libtpu: 0.0.40
codegen_flags: <defaults>
</compile_context>

<pallas_src>
import functools

import jax
import jax.numpy as jnp
from jax.experimental import pallas as pl
from jax.experimental.pallas import tpu as pltpu

_MIB = 1024 * 1024


def _round_up(x: int, m: int) -> int:
    return (x + m - 1) // m * m


def _chip_config():
    """Per-generation tile defaults + VMEM budget (conservative fallbacks)."""
    kind = ""
    try:
        kind = jax.devices()[0].device_kind.lower()
    except Exception:
        pass
    vmem_cap = None
    try:
        vmem_cap = int(pltpu.get_tpu_info().vmem_capacity_bytes)
    except Exception:
        vmem_cap = None

    if "v7" in kind or (vmem_cap is not None and vmem_cap <= 96 * _MIB):
        # v7x: 64 MiB VMEM per TC, 3.2 TB/s HBM -> ~310 flop/byte; 2 TCs/chip.
        return dict(tm=512, tv=1024, vmem_cap=vmem_cap or 64 * _MIB,
                    two_tc=True)
    if "v5" in kind:
        # v5e: ~240 flop/byte needed; modest tiles (f32-only VPU, 1 vst slot).
        return dict(tm=512, tv=512, vmem_cap=vmem_cap or 128 * _MIB,
                    two_tc=False)
    # v6e (and default): ~640 flop/byte needed -> large token tiles.
    return dict(tm=1024, tv=1024, vmem_cap=vmem_cap or 128 * _MIB,
                two_tc=False)


def _vmem_bytes(tm: int, tv: int, d: int, in_itemsize: int) -> int:
    """Honest per-step VMEM demand estimate."""
    tiles = 2 * (tm + tv) * d * in_itemsize      # double-buffered h / W tiles
    temps = 3 * tm * tv * 4                      # f32 logits / exp / bias temps
    scratch = 2 * tm * 128 * 4                   # (tm,1) f32 scratch, lane-padded
    out = 2 * tm * 128 * 4                       # lse out tile (double-buffered)
    return tiles + temps + scratch + out


def _lse_kernel(h_ref, w_ref, lse_ref, m_sc, l_sc, *, v_total: int, tv: int,
                mask_vocab: bool):
    """One (token_tile, vocab_tile) step of the online log-sum-exp.

    h_ref  : [TM, D]  hidden states for this token tile (bf16 or f32)
    w_ref  : [TV, D]  weight rows for this vocab tile   (bf16 or f32)
    lse_ref: [TM, 1]  per-token logsumexp (written on the last vocab step)
    m_sc, l_sc : [TM, 1] f32 scratch (running max, running sum-exp)
    """
    j = pl.program_id(1)

    @pl.when(j == 0)
    def _():
        m_sc[...] = jnp.full_like(m_sc, -jnp.inf)
        l_sc[...] = jnp.zeros_like(l_sc)

    # logits[TM, TV] = h @ W_tile.T  (low-precision inputs, f32 MXU accumulate)
    logits = jax.lax.dot_general(
        h_ref[...], w_ref[...],
        dimension_numbers=(((1,), (1,)), ((), ())),
        preferred_element_type=jnp.float32,
    )

    if mask_vocab:
        # Only traced when V % tv != 0.  Build a [1, tv] additive 0/-inf bias
        # row (tiny) and broadcast-add it: 1 VPU op per logit element instead
        # of the old full-tile iota + compare + select.
        col = jax.lax.broadcasted_iota(jnp.int32, (1, tv), 1)
        bias = jnp.where(col < (v_total - j * tv), 0.0, -jnp.inf)
        logits = logits + bias

    # Online log-sum-exp over the vocab axis (f32 accumulators).
    m_new = jnp.maximum(m_sc[...], logits.max(axis=-1, keepdims=True))
    alpha = jnp.exp(m_sc[...] - m_new)
    l_sc[...] = alpha * l_sc[...] + jnp.exp(logits - m_new).sum(axis=-1,
                                                                keepdims=True)
    m_sc[...] = m_new

    @pl.when(j == pl.num_programs(1) - 1)
    def _():
        lse_ref[...] = m_sc[...] + jnp.log(l_sc[...])


def linear_cross_entropy_loss(hidden, targets, weight, *,
                              ignore_index: int = -100,
                              tm: int | None = None, tv: int | None = None):
    """Fused output-projection + cross-entropy(sum over valid) / n_valid.

    hidden : [B, S, D]  (bf16 recommended; f32 also works)
    targets: [B, S]     int32 (ignore_index entries are excluded)
    weight : [V, D]     nn.Linear layout, same dtype as hidden recommended
    tm, tv : token / vocab tile sizes; default to chip-aware values.
    Returns scalar f32 mean loss over valid tokens (0.0 if none are valid).
    """
    B, S, D = hidden.shape
    V = weight.shape[0]
    N = B * S

    cfg = _chip_config()
    tm = cfg["tm"] if tm is None else tm
    tv = cfg["tv"] if tv is None else tv
    vmem_cap = cfg["vmem_cap"]

    h = hidden.reshape(N, D)
    t = targets.reshape(N).astype(jnp.int32)

    # ---- Tile-size selection ------------------------------------------------
    tm_eff = _round_up(min(tm, _round_up(N, 16)), 16)
    tv_eff = _round_up(min(tv, _round_up(V, 128)), 128)

    # v7x only: keep >= 2 token tiles so the "parallel" token axis feeds both
    # TensorCores (a single tile would idle one core — instant 2x loss).
    if cfg["two_tc"] and N >= 32:
        tm_eff = min(tm_eff, _round_up((N + 1) // 2, 16))

    # Auto-shrink tiles until the honest VMEM estimate (+25% margin) fits the
    # per-core budget.  Shrink tv first (does not hurt arithmetic intensity,
    # which scales with tm), then tm.
    itemsize = jnp.dtype(h.dtype).itemsize
    budget = int(vmem_cap * 0.80)
    while int(_vmem_bytes(tm_eff, tv_eff, D, itemsize) * 1.25) > budget:
        if tv_eff > 512:
            tv_eff = _round_up(tv_eff // 2, 128)
        elif tm_eff > 256:
            tm_eff = _round_up(tm_eff // 2, 16)
        elif tv_eff > 128:
            tv_eff = _round_up(tv_eff // 2, 128)
        elif tm_eff > 16:
            tm_eff = _round_up(tm_eff // 2, 16)
        else:
            break

    # Pad the token axis (cheap, N*D) so the grid divides evenly; padded zero
    # rows are discarded below.  The weight is never copied or padded.
    n_pad = _round_up(N, tm_eff)
    if n_pad != N:
        h = jnp.pad(h, ((0, n_pad - N), (0, 0)))

    n_tok_tiles = n_pad // tm_eff
    n_voc_tiles = pl.cdiv(V, tv_eff)
    mask_vocab = (V % tv_eff) != 0

    vmem_limit = int(min(max(_vmem_bytes(tm_eff, tv_eff, D, itemsize) * 1.25,
                             32 * _MIB),
                         budget))

    w_itemsize = jnp.dtype(weight.dtype).itemsize
    cost = pl.CostEstimate(
        flops=2 * n_pad * V * D,
        transcendentals=n_pad * V,
        bytes_accessed=int(n_tok_tiles * V * D * w_itemsize
                           + n_pad * D * itemsize + n_pad * 4),
    )

    lse = pl.pallas_call(
        functools.partial(_lse_kernel, v_total=V, tv=tv_eff,
                          mask_vocab=mask_vocab),
        out_shape=jax.ShapeDtypeStruct((n_pad, 1), jnp.float32),
        grid_spec=pltpu.PrefetchScalarGridSpec(
            num_scalar_prefetch=0,
            grid=(n_tok_tiles, n_voc_tiles),
            in_specs=[
                pl.BlockSpec((tm_eff, D), lambda i, j: (i, 0)),   # hidden tile
                # TODO(synk): if xprof still shows exposed weight DMA once
                # MXU-bound, try pipeline_mode=pl.Buffered(3) here and grow
                # vmem_limit accordingly.
                pl.BlockSpec((tv_eff, D), lambda i, j: (j, 0)),   # weight rows
            ],
            out_specs=pl.BlockSpec((tm_eff, 1), lambda i, j: (i, 0)),
            scratch_shapes=[pltpu.VMEM((tm_eff, 1), jnp.float32)] * 2,
        ),
        compiler_params=pltpu.CompilerParams(
            dimension_semantics=("parallel", "arbitrary"),
            vmem_limit_bytes=vmem_limit),
        cost_estimate=cost,
    )(h, weight)

    lse = lse[:N, 0]                                   # drop token padding

    # Target logit: once per token, O(N*D).  Inputs stay in their caller
    # dtype (bf16), accumulation forced to f32 — no [N, D] f32 intermediates.
    valid = t != ignore_index
    safe_t = jnp.where(valid, t, 0)
    w_tgt = weight[safe_t]                              # [N, D], caller dtype
    tgt_logit = jnp.einsum("nd,nd->n", hidden.reshape(N, D), w_tgt,
                           preferred_element_type=jnp.float32)

    per_tok = jnp.where(valid, lse - tgt_logit, 0.0)
    n_valid = valid.sum()
    return jnp.where(n_valid > 0,
                     per_tok.sum() / n_valid.astype(jnp.float32),
                     jnp.float32(0.0))


def _reference_loss(hidden, targets, weight, ignore_index=-100):
    """Pure-JAX reference matching F.cross_entropy(reduction='sum')/n_valid."""
    B, S, D = hidden.shape
    h = hidden.reshape(-1, D).astype(jnp.float32)
    t = targets.reshape(-1)
    logits = h @ weight.astype(jnp.float32).T
    lse = jax.scipy.special.logsumexp(logits, axis=-1)
    tgt_logit = jnp.take_along_axis(
        logits, jnp.clip(t, 0, weight.shape[0] - 1)[:, None], axis=-1)[:, 0]
    per_tok = jnp.where(t != ignore_index, lse - tgt_logit, 0.0)
    n_valid = (t != ignore_index).sum()
    return jnp.where(n_valid > 0, per_tok.sum() / n_valid.astype(jnp.float32),
                     jnp.float32(0.0))


if __name__ == "__main__":
    # Small shapes: batch=2, seq=8, hidden=32, vocab=256 (bf16 inputs).
    B, S, D, V = 2, 8, 32, 256
    key = jax.random.PRNGKey(0)
    k_h, k_w, k_t = jax.random.split(key, 3)

    hidden = jax.random.normal(k_h, (B, S, D), dtype=jnp.float32)
    hidden = hidden.astype(jnp.bfloat16)
    weight = (0.02 * jax.random.normal(k_w, (V, D), dtype=jnp.float32))
    weight = weight.astype(jnp.bfloat16)                # nn.Linear [V, D]
    targets = jax.random.randint(k_t, (B, S), 0, V, dtype=jnp.int32)
    targets = targets.at[0, 0].set(-100).at[1, 3].set(-100)  # ignored tokens

    loss = linear_cross_entropy_loss(hidden, targets, weight)
    jax.block_until_ready(loss)

    ref = _reference_loss(hidden, targets, weight)
    assert jnp.allclose(loss, ref, rtol=2e-4, atol=2e-4), (loss, ref)

    print("KERNEL_OK")
</pallas_src>

<mosaic_0001>
module attributes {stable_mosaic.version = 11 : i64} {
  func.func @_lse_kernel(%arg0: i32, %arg1: i32, %arg2: memref<16x32xbf16, #tpu.memory_space<vmem>>, %arg3: memref<256x32xbf16, #tpu.memory_space<vmem>>, %arg4: memref<16x1xf32, #tpu.memory_space<vmem>>, %arg5: memref<16x1xf32, #tpu.memory_space<vmem>>, %arg6: memref<16x1xf32, #tpu.memory_space<vmem>>) attributes {dimension_semantics = [#tpu.dimension_semantics<parallel>, #tpu.dimension_semantics<arbitrary>], iteration_bounds = array<i64: 1, 1>, scalar_prefetch = 0 : i64, scratch_operands = 2 : i64, tpu.core_type = #tpu.core_type<tc>, window_params = [{transform_indices = @transform_0, window_bounds = array<i64: 16, 32>}, {transform_indices = @transform_1, window_bounds = array<i64: 256, 32>}, {transform_indices = @transform_2, window_bounds = array<i64: 16, 1>}]} {
    %c0_i32 = arith.constant 0 : i32
    %0 = arith.cmpi eq, %arg1, %c0_i32 : i32
    %1 = arith.extui %0 : i1 to i32
    %c0_i32_0 = arith.constant 0 : i32
    %2 = arith.cmpi ne, %1, %c0_i32_0 : i32
    scf.if %2 {
      %cst_18 = arith.constant 0xFF800000 : f32
      %26 = vector.broadcast %cst_18 : f32 to vector<16x1xf32>
      %c0_19 = arith.constant 0 : index
      %c0_20 = arith.constant 0 : index
      %27 = vector.load %arg5[%c0_19, %c0_20] : memref<16x1xf32, #tpu.memory_space<vmem>>, vector<16x1xf32>
      tpu.vector_store %arg5[%c0_19, %c0_20], %26 {strides = array<i32>} : memref<16x1xf32, #tpu.memory_space<vmem>>, vector<16x1xf32>,
      %cst_21 = arith.constant 0.000000e+00 : f32
      %28 = vector.broadcast %cst_21 : f32 to vector<16x1xf32>
      %c0_22 = arith.constant 0 : index
      %c0_23 = arith.constant 0 : index
      %29 = vector.load %arg6[%c0_22, %c0_23] : memref<16x1xf32, #tpu.memory_space<vmem>>, vector<16x1xf32>
      tpu.vector_store %arg6[%c0_22, %c0_23], %28 {strides = array<i32>} : memref<16x1xf32, #tpu.memory_space<vmem>>, vector<16x1xf32>,
    } else {
    }
    %c0 = arith.constant 0 : index
    %c0_1 = arith.constant 0 : index
    %3 = vector.load %arg2[%c0, %c0_1] : memref<16x32xbf16, #tpu.memory_space<vmem>>, vector<16x32xbf16>
    %c0_2 = arith.constant 0 : index
    %c0_3 = arith.constant 0 : index
    %4 = vector.load %arg3[%c0_2, %c0_3] : memref<256x32xbf16, #tpu.memory_space<vmem>>, vector<256x32xbf16>
    %cst = arith.constant dense<0.000000e+00> : vector<16x256xf32>
    %5 = tpu.matmul %3, %4, %cst {dimension_numbers = #tpu.dot_dimension_numbers<[1], [1], [0], [0], [0, 0, 1, 0], [], []>} : vector<16x32xbf16>, vector<256x32xbf16>, vector<16x256xf32> -> vector<16x256xf32>
    %c0_4 = arith.constant 0 : index
    %c0_5 = arith.constant 0 : index
    %6 = vector.load %arg5[%c0_4, %c0_5] : memref<16x1xf32, #tpu.memory_space<vmem>>, vector<16x1xf32>
    %cst_6 = arith.constant dense<0xFF800000> : vector<16xf32>
    %7 = vector.multi_reduction <maximumf>, %5, %cst_6 [1] : vector<16x256xf32> to vector<16xf32>
    %8 = vector.shape_cast %7 : vector<16xf32> to vector<16x1xf32>
    %9 = arith.maximumf %6, %8 : vector<16x1xf32>
    %c0_7 = arith.constant 0 : index
    %c0_8 = arith.constant 0 : index
    %10 = vector.load %arg5[%c0_7, %c0_8] : memref<16x1xf32, #tpu.memory_space<vmem>>, vector<16x1xf32>
    %11 = arith.subf %10, %9 : vector<16x1xf32>
    %12 = math.exp %11 : vector<16x1xf32>
    %c0_9 = arith.constant 0 : index
    %c0_10 = arith.constant 0 : index
    %13 = vector.load %arg6[%c0_9, %c0_10] : memref<16x1xf32, #tpu.memory_space<vmem>>, vector<16x1xf32>
    %14 = arith.mulf %12, %13 : vector<16x1xf32>
    %15 = vector.broadcast %9 : vector<16x1xf32> to vector<16x256xf32>
    %16 = arith.subf %5, %15 : vector<16x256xf32>
    %17 = math.exp %16 : vector<16x256xf32>
    %cst_11 = arith.constant dense<0.000000e+00> : vector<16xf32>
    %18 = vector.multi_reduction <add>, %17, %cst_11 [1] : vector<16x256xf32> to vector<16xf32>
    %19 = vector.shape_cast %18 : vector<16xf32> to vector<16x1xf32>
    %20 = arith.addf %14, %19 : vector<16x1xf32>
    %c0_12 = arith.constant 0 : index
    %c0_13 = arith.constant 0 : index
    %21 = vector.load %arg6[%c0_12, %c0_13] : memref<16x1xf32, #tpu.memory_space<vmem>>, vector<16x1xf32>
    tpu.vector_store %arg6[%c0_12, %c0_13], %20 {strides = array<i32>} : memref<16x1xf32, #tpu.memory_space<vmem>>, vector<16x1xf32>,
    %c0_14 = arith.constant 0 : index
    %c0_15 = arith.constant 0 : index
    %22 = vector.load %arg5[%c0_14, %c0_15] : memref<16x1xf32, #tpu.memory_space<vmem>>, vector<16x1xf32>
    tpu.vector_store %arg5[%c0_14, %c0_15], %9 {strides = array<i32>} : memref<16x1xf32, #tpu.memory_space<vmem>>, vector<16x1xf32>,
    %c0_i32_16 = arith.constant 0 : i32
    %23 = arith.cmpi eq, %arg1, %c0_i32_16 : i32
    %24 = arith.extui %23 : i1 to i32
    %c0_i32_17 = arith.constant 0 : i32
    %25 = arith.cmpi ne, %24, %c0_i32_17 : i32
    scf.if %25 {
      %c0_18 = arith.constant 0 : index
      %c0_19 = arith.constant 0 : index
      %26 = vector.load %arg5[%c0_18, %c0_19] : memref<16x1xf32, #tpu.memory_space<vmem>>, vector<16x1xf32>
      %c0_20 = arith.constant 0 : index
      %c0_21 = arith.constant 0 : index
      %27 = vector.load %arg6[%c0_20, %c0_21] : memref<16x1xf32, #tpu.memory_space<vmem>>, vector<16x1xf32>
      %28 = math.log %27 : vector<16x1xf32>
      %29 = arith.addf %26, %28 : vector<16x1xf32>
      %c0_22 = arith.constant 0 : index
      %c0_23 = arith.constant 0 : index
      %30 = vector.load %arg4[%c0_22, %c0_23] : memref<16x1xf32, #tpu.memory_space<vmem>>, vector<16x1xf32>
      tpu.vector_store %arg4[%c0_22, %c0_23], %29 {strides = array<i32>} : memref<16x1xf32, #tpu.memory_space<vmem>>, vector<16x1xf32>,
    } else {
    }
    return
  }
  func.func @transform_0(%arg0: i32, %arg1: i32) -> (i32, i32) {
    %c0_i32 = arith.constant 0 : i32
    %c0_i32_0 = arith.constant 0 : i32
    return %arg0, %c0_i32 : i32, i32
  }
  func.func @transform_1(%arg0: i32, %arg1: i32) -> (i32, i32) {
    %c0_i32 = arith.constant 0 : i32
    %c0_i32_0 = arith.constant 0 : i32
    return %arg1, %c0_i32 : i32, i32
  }
  func.func @transform_2(%arg0: i32, %arg1: i32) -> (i32, i32) {
    %c0_i32 = arith.constant 0 : i32
    %c0_i32_0 = arith.constant 0 : i32
    return %arg0, %c0_i32 : i32, i32
  }
}

</mosaic_0001>

<llo_original>
// kernel: tpu_custom_call.1
$region0: #{tpu_custom_call.1}
  #allocation0 [shape = 'u32[]', space=smem, size = 0x4, offset = 0x4, fixed_abs, tag = 'smem constant byte address 0x4 - core index']
  #allocation1 [shape = 'u32[144,128]{1,0:T(1,128)}', space=vmem, size = 0x12000, scoped, tag = 'internal scratch']
  #allocation2 [shape = 'f32[16,1]{1,0:T(8,128)}', space=vmem, size = 0x2000, scoped, tag = 'scratch operand']
  #allocation3 [shape = 'f32[16,1]{1,0:T(8,128)}', space=vmem, size = 0x2000, scoped, tag = 'scratch operand']
  %s0 = inlined_call_operand.vmem [shape: bf16[16,32], index: 0, kind: input, shape index: {}]
  %s1 = inlined_call_operand.vmem [shape: bf16[256,32], index: 1, kind: input, shape index: {}]
  %s2 = inlined_call_operand.vmem [shape: f32[16,1], index: 2, kind: output, shape index: {}]
  %s3 = sld [smem:[#allocation0]]
  $region26: #{tpu_custom_call.1} parent=0
    _
  %s5 = ssub.s32 1, %s3
  %s6 = scalar_select 0, %s5, %s3
  // Predicated region
  $region2: #{tpu_custom_call.1} parent=0 // pred_check
    _
  $region3: #{tpu_custom_call.1} parent=0 // pred_check_branch
    %8 = sbr.rel (0) target = $region5
  $region4: #{tpu_custom_call.1} parent=0 // pred_region
    _
  $region5: #{tpu_custom_call.1} parent=0 // pred_fallthru
    _
  // Predicated region
  $region6: #{tpu_custom_call.1} parent=0 // pred_check
    _
  $region7: #{tpu_custom_call.1} parent=0 // pred_check_branch
    %10 = sbr.rel (0) target = $region9
  $region8: #{tpu_custom_call.1} parent=0 // pred_region
    _
  $region9: #{tpu_custom_call.1} parent=0 // pred_fallthru
    _
  %p12 = scmp.eq.s32.totalorder 0, 0
  // Predicated region
  $region10: #{tpu_custom_call.1} parent=0 // pred_check
    %p13 = pneg %p12
  $region11: #{tpu_custom_call.1} parent=0 // pred_check_branch
    %15 = sbr.rel (%p13) target = $region13
  $region12: #{tpu_custom_call.1} parent=0 // pred_region
    %vm16 = vcmask 7168
    %17 = vst.msk [vmem:[#allocation2] sm:$0xff] %vm16, -inf
    %18 = vst.msk [vmem:[#allocation2 + $0x8] sm:$0xff] %vm16, -inf
    %19 = vst.msk [vmem:[#allocation3] sm:$0xff] %vm16, 0.0
    %20 = vst.msk [vmem:[#allocation3 + $0x8] sm:$0xff] %vm16, 0.0
  $region13: #{tpu_custom_call.1} parent=0 // pred_fallthru
    _
  %v21 = vld [vmem:[%s0] sm:$0xf]
  %v22 = vld [vmem:[%s0 + $0x4] sm:$0xf]
  %v23 = vld [vmem:[%s1] sm:$0xf]
  %v24 = vld [vmem:[%s1 + $0x4] sm:$0xf]
  %v25 = vld [vmem:[%s1 + $0x8] sm:$0xf]
  %v26 = vld [vmem:[%s1 + $0xc] sm:$0xf]
  %v27 = vld [vmem:[%s1 + $0x10] sm:$0xf]
  %v28 = vld [vmem:[%s1 + $0x14] sm:$0xf]
  %v29 = vld [vmem:[%s1 + $0x18] sm:$0xf]
  %v30 = vld [vmem:[%s1 + $0x1c] sm:$0xf]
  %v31 = vld [vmem:[%s1 + $0x20] sm:$0xf]
  %v32 = vld [vmem:[%s1 + $0x24] sm:$0xf]
  %v33 = vld [vmem:[%s1 + $0x28] sm:$0xf]
  %v34 = vld [vmem:[%s1 + $0x2c] sm:$0xf]
  %v35 = vld [vmem:[%s1 + $0x30] sm:$0xf]
  %v36 = vld [vmem:[%s1 + $0x34] sm:$0xf]
  %v37 = vld [vmem:[%s1 + $0x38] sm:$0xf]
  %v38 = vld [vmem:[%s1 + $0x3c] sm:$0xf]
  %v39 = vld [vmem:[%s1 + $0x40] sm:$0xf]
  %v40 = vld [vmem:[%s1 + $0x44] sm:$0xf]
  %v41 = vld [vmem:[%s1 + $0x48] sm:$0xf]
  %v42 = vld [vmem:[%s1 + $0x4c] sm:$0xf]
  %v43 = vld [vmem:[%s1 + $0x50] sm:$0xf]
  %v44 = vld [vmem:[%s1 + $0x54] sm:$0xf]
  %v45 = vld [vmem:[%s1 + $0x58] sm:$0xf]
  %v46 = vld [vmem:[%s1 + $0x5c] sm:$0xf]
  %v47 = vld [vmem:[%s1 + $0x60] sm:$0xf]
  %v48 = vld [vmem:[%s1 + $0x64] sm:$0xf]
  %v49 = vld [vmem:[%s1 + $0x68] sm:$0xf]
  %v50 = vld [vmem:[%s1 + $0x6c] sm:$0xf]
  %v51 = vld [vmem:[%s1 + $0x70] sm:$0xf]
  %v52 = vld [vmem:[%s1 + $0x74] sm:$0xf]
  %v53 = vld [vmem:[%s1 + $0x78] sm:$0xf]
  %v54 = vld [vmem:[%s1 + $0x7c] sm:$0xf]
  %v57 = vunpack.c.l.b16 %v21
  %v58 = vunpack.c.l.b16 %v22
  %v59 = vpack.c.b16 %v58, %v57
  %v92 = vunpack.c.l.b16 %v23
  %v93 = vunpack.c.l.b16 %v24
  %v94 = vunpack.c.l.b16 %v25
  %v95 = vunpack.c.l.b16 %v26
  %v96 = vunpack.c.l.b16 %v27
  %v97 = vunpack.c.l.b16 %v28
  %v98 = vunpack.c.l.b16 %v29
  %v99 = vunpack.c.l.b16 %v30
  %v100 = vunpack.c.l.b16 %v31
  %v101 = vunpack.c.l.b16 %v32
  %v102 = vunpack.c.l.b16 %v33
  %v103 = vunpack.c.l.b16 %v34
  %v104 = vunpack.c.l.b16 %v35
  %v105 = vunpack.c.l.b16 %v36
  %v106 = vunpack.c.l.b16 %v37
  %v107 = vunpack.c.l.b16 %v38
  %v108 = vunpack.c.l.b16 %v39
  %v109 = vunpack.c.l.b16 %v40
  %v110 = vunpack.c.l.b16 %v41
  %v111 = vunpack.c.l.b16 %v42
  %v112 = vunpack.c.l.b16 %v43
  %v113 = vunpack.c.l.b16 %v44
  %v114 = vunpack.c.l.b16 %v45
  %v115 = vunpack.c.l.b16 %v46
  %v116 = vunpack.c.l.b16 %v47
  %v117 = vunpack.c.l.b16 %v48
  %v118 = vunpack.c.l.b16 %v49
  %v119 = vunpack.c.l.b16 %v50
  %v120 = vunpack.c.l.b16 %v51
  %v121 = vunpack.c.l.b16 %v52
  %v122 = vunpack.c.l.b16 %v53
  %v123 = vunpack.c.l.b16 %v54
  %v124 = vpack.c.b16 %v93, %v92
  %v125 = vpack.c.b16 %v95, %v94
  %v126 = vpack.c.b16 %v97, %v96
  %v127 = vpack.c.b16 %v99, %v98
  %v128 = vpack.c.b16 %v101, %v100
  %v129 = vpack.c.b16 %v103, %v102
  %v130 = vpack.c.b16 %v105, %v104
  %v131 = vpack.c.b16 %v107, %v106
  %v132 = vpack.c.b16 %v109, %v108
  %v133 = vpack.c.b16 %v111, %v110
  %v134 = vpack.c.b16 %v113, %v112
  %v135 = vpack.c.b16 %v115, %v114
  %v136 = vpack.c.b16 %v117, %v116
  %v137 = vpack.c.b16 %v119, %v118
  %v138 = vpack.c.b16 %v121, %v120
  %v139 = vpack.c.b16 %v123, %v122
  %vm140 = vcmask 261120
  %v142 = vsel %vm140, %v59, 0
  %v145 = vsel %vm140, %v124, 0
  %v148 = vsel %vm140, %v125, 0
  %v151 = vsel %vm140, %v126, 0
  %v154 = vsel %vm140, %v127, 0
  %v157 = vsel %vm140, %v128, 0
  %v160 = vsel %vm140, %v129, 0
  %v163 = vsel %vm140, %v130, 0
  %v166 = vsel %vm140, %v131, 0
  %v169 = vsel %vm140, %v132, 0
  %v172 = vsel %vm140, %v133, 0
  %v175 = vsel %vm140, %v134, 0
  %v178 = vsel %vm140, %v135, 0
  %v181 = vsel %vm140, %v136, 0
  %v184 = vsel %vm140, %v137, 0
  %v187 = vsel %vm140, %v138, 0
  %v190 = vsel %vm140, %v139, 0
  %192 = vmatprep.subr.bf16.mxu0 0
  %193 = vmatpush1.bf16.xpose.msra.mxu0 %v166
  %194 = vmatprep.subr.bf16.mxu0 0
  %195 = vmatpush1.bf16.xpose.msra.mxu0 %v163
  %196 = vmatprep.subr.bf16.mxu0 0
  %197 = vmatpush1.bf16.xpose.msra.mxu0 %v160
  %198 = vmatprep.subr.bf16.mxu0 0
  %199 = vmatpush1.bf16.xpose.msra.mxu0 %v157
  %200 = vmatprep.subr.bf16.mxu0 0
  %201 = vmatpush1.bf16.xpose.msra.mxu0 %v154
  %202 = vmatprep.subr.bf16.mxu0 0
  %203 = vmatpush1.bf16.xpose.msra.mxu0 %v151
  %204 = vmatprep.subr.bf16.mxu0 0
  %205 = vmatpush1.bf16.xpose.msra.mxu0 %v148
  %206 = vmatprep.subr.bf16.mxu0 0
  %207 = vmatpush1.bf16.xpose.msra.mxu0 %v145
  %208 = vmatprep.subr.bf16.mxu0 0
  %209 = vmatpush2.bf16.xpose.msra.mxu0 %v190
  %210 = vmatprep.subr.bf16.mxu0 0
  %211 = vmatpush2.bf16.xpose.msra.mxu0 %v187
  %212 = vmatprep.subr.bf16.mxu0 0
  %213 = vmatpush2.bf16.xpose.msra.mxu0 %v184
  %214 = vmatprep.subr.bf16.mxu0 0
  %215 = vmatpush2.bf16.xpose.msra.mxu0 %v181
  %216 = vmatprep.subr.bf16.mxu0 0
  %217 = vmatpush2.bf16.xpose.msra.mxu0 %v178
  %218 = vmatprep.subr.bf16.mxu0 0
  %219 = vmatpush2.bf16.xpose.msra.mxu0 %v175
  %220 = vmatprep.subr.bf16.mxu0 0
  %221 = vmatpush2.bf16.xpose.msra.mxu0 %v172
  %222 = vmatprep.subr.bf16.mxu0 0
  %223 = vmatpush2.bf16.xpose.msra.mxu0 %v169
  %224 = vmatprep.mubr.bf16.mxu0 0
  %225 = vmatmul.mubr.bf16.gmra.mxu0 %v142
  %v226 = vpop.f32.mrf.mxu0
  %v227 = vadd.f32 0.0, %v226
  %v228 = vpop.f32.mrf.mxu0
  %v229 = vadd.f32 0.0, %v228
  %v230 = vpop.f32.mrf.mxu0
  %v231 = vadd.f32 0.0, %v230
  %v232 = vpop.f32.mrf.mxu0
  %v233 = vadd.f32 0.0, %v232
  %234 = vdwg.mxu0
  %v235 = vld [vmem:[#allocation2] sm:$0xff]
  %v236 = vld [vmem:[#allocation2 + $0x8] sm:$0xff]
  %v237 = vmax.f32 %v227, %v229
  %238 = vmax.xlane.f32.xlu0 %v237
  %v239 = vpop.xlane.xlu0 %238
  %v240 = vmax.f32 %v231, %v233
  %241 = vmax.xlane.f32.xlu0 %v240
  %v242 = vpop.xlane.xlu0 %241
  %v243 = vmax.f32 %v235, %v239
  %v244 = vmax.f32 %v236, %v242
  %v245 = vsub.f32 %v235, %v243
  %v246 = vsub.f32 %v236, %v244
  %v247 = vmul.f32 %v245, 1.442695
  %v248 = vpow.pop %v247
  %v249 = vmul.f32 %v246, 1.442695
  %v250 = vpow.pop %v249
  %v251 = vld [vmem:[#allocation3] sm:$0xff]
  %v252 = vld [vmem:[#allocation3 + $0x8] sm:$0xff]
  %v253 = vmul.f32 %v248, %v251
  %v254 = vmul.f32 %v250, %v252
  %256 = vset.pattern.permute.xlu0 0
  %257 = vperm.xlu0 %256, %v243
  %v258 = vpop.permute.xlu0 %257
  %261 = vset.pattern.permute.xlu0 0
  %262 = vperm.xlu0 %261, %v244
  %v263 = vpop.permute.xlu0 %262
  %v265 = vsub.f32 %v227, %v258
  %v266 = vsub.f32 %v229, %v258
  %v267 = vsub.f32 %v231, %v263
  %v268 = vsub.f32 %v233, %v263
  %v269 = vmul.f32 %v265, 1.442695
  %v270 = vpow.pop %v269
  %v271 = vmul.f32 %v266, 1.442695
  %v272 = vpow.pop %v271
  %v273 = vmul.f32 %v267, 1.442695
  %v274 = vpow.pop %v273
  %v275 = vmul.f32 %v268, 1.442695
  %v276 = vpow.pop %v275
  %v277 = vadd.f32 %v270, %v272
  %278 = vadd.xlane.f32.xlu0 %v277
  %v279 = vpop.xlane.xlu0 %278
  %v280 = vadd.f32 %v274, %v276
  %281 = vadd.xlane.f32.xlu0 %v280
  %v282 = vpop.xlane.xlu0 %281
  %v283 = vadd.f32 %v253, %v279
  %v284 = vadd.f32 %v254, %v282
  %vm285 = vcmask 7168
  %286 = vst.msk [vmem:[#allocation3] sm:$0xff] %vm285, %v283
  %287 = vst.msk [vmem:[#allocation3 + $0x8] sm:$0xff] %vm285, %v284
  %288 = vst.msk [vmem:[#allocation2] sm:$0xff] %vm285, %v243
  %289 = vst.msk [vmem:[#allocation2 + $0x8] sm:$0xff] %vm285, %v244
  // Predicated region
  $region14: #{tpu_custom_call.1} parent=0 // pred_check
    %p290 = pneg %p12
  $region15: #{tpu_custom_call.1} parent=0 // pred_check_branch
    %292 = sbr.rel (%p290) target = $region17
  $region16: #{tpu_custom_call.1} parent=0 // pred_region
    %v293 = vld [vmem:[#allocation2] sm:$0xff]
    %v294 = vld [vmem:[#allocation2 + $0x8] sm:$0xff]
    %v295 = vld [vmem:[#allocation3] sm:$0xff]
    %v296 = vld [vmem:[#allocation3 + $0x8] sm:$0xff]
    %v297 = vlog2.pop %v295
    %v298 = vmul.f32 %v297, 0.6931472
    %v299 = vlog2.pop %v296
    %v300 = vmul.f32 %v299, 0.6931472
    %v301 = vadd.f32 %v293, %v298
    %v302 = vadd.f32 %v294, %v300
    %303 = vst.msk [vmem:[%s2] sm:$0xff] %vm285, %v301
    %304 = vst.msk [vmem:[%s2 + $0x8] sm:$0xff] %vm285, %v302
  $region17: #{tpu_custom_call.1} parent=0 // pred_fallthru
    _
  // Predicated region
  $region18: #{tpu_custom_call.1} parent=0 // pred_check
    _
  $region19: #{tpu_custom_call.1} parent=0 // pred_check_branch
    %306 = sbr.rel (0) target = $region21
  $region20: #{tpu_custom_call.1} parent=0 // pred_region
    _
  $region21: #{tpu_custom_call.1} parent=0 // pred_fallthru
    _
  // Predicated region
  $region22: #{tpu_custom_call.1} parent=0 // pred_check
    _
  $region23: #{tpu_custom_call.1} parent=0 // pred_check_branch
    %308 = sbr.rel (0) target = $region25
  $region24: #{tpu_custom_call.1} parent=0 // pred_region
    _
  $region25: #{tpu_custom_call.1} parent=0 // pred_fallthru
    _

</llo_original>
